<compile_context>
chip_gen: v7x
topology: tpu7x:2x2x1
jax: 0.10.0
libtpu: 0.0.40
codegen_flags: <defaults>
</compile_context>

<pallas_src>
import jax
import jax.numpy as jnp
from jax.experimental import pallas as pl
from jax.experimental.pallas import tpu as pltpu


def _bayesian_dnn_kernel(rx_ref, u_ref,
                         w1_ref, b1_ref,
                         w2_ref, b2_ref,
                         w3_ref, b3_ref,
                         kp_ref,
                         o_ref):
    ensemble_num, tile_n, _ = u_ref.shape

    rx = rx_ref[...]

    # fc1 + ReLU and fc2 (shared across ensemble members).
    x1 = jnp.dot(rx, w1_ref[...], preferred_element_type=jnp.float32) + b1_ref[...]
    x1 = jnp.maximum(x1, 0.0)
    x2 = jnp.dot(x1, w2_ref[...], preferred_element_type=jnp.float32) + b2_ref[...]
    # relu(x2 * z) with z in {0,1}  ==  where(z, relu(x2), 0): hoist the ReLU.
    x2r = jnp.maximum(x2, 0.0)

    kp = kp_ref[...]                      # (1, H) keep-prob = sigmoid(dropout_logit)

    # Per-ensemble ARM dropout mask, then stack all members row-wise so the E
    # tiny fc3 matmuls fuse into ONE MXU call.  E is tiny -> static unroll.
    masked = [jnp.where(u_ref[e] < kp, x2r, 0.0) for e in range(ensemble_num)]
    h2d = jnp.concatenate(masked, axis=0)                      # (E*tile_n, H)

    out = jnp.dot(h2d, w3_ref[...],
                  preferred_element_type=jnp.float32) + b3_ref[...]  # (E*tile_n, S_pad)

    # Stable log_softmax over the (padded) states axis.  Padded lanes carry
    # bias -1e30 -> their exp underflows to 0, so real lanes stay exact.
    m = jnp.max(out, axis=-1, keepdims=True)
    lse = jnp.log(jnp.sum(jnp.exp(out - m), axis=-1, keepdims=True)) + m
    lp = out - lse                                             # (E*tile_n, S_pad)

    # Accumulate the E row-blocks (static, sublane-tile-aligned slices), average.
    acc = lp[0:tile_n, :]
    for e in range(1, ensemble_num):
        acc = acc + lp[e * tile_n:(e + 1) * tile_n, :]
    o_ref[...] = acc * (1.0 / ensemble_num)


def bayesian_dnn_forward(rx, u, w1, b1, w2, b2, w3, b3, dropout_logit,
                         *, tile_n=None):
    """rx: (N, D_in) f32; u: (E, N, H) f32; returns (N, n_states) f32 log-probs."""
    N, d_in = rx.shape
    E, _, H = u.shape
    n_states = w3.shape[1]

    # Row tile: whole (sublane-padded) batch when small, else 512-row tiles.
    if tile_n is None:
        tile_n = 512 if N > 512 else 8 * pl.cdiv(N, 8)
    assert tile_n % 8 == 0
    n_pad = tile_n * pl.cdiv(N, tile_n)

    rx_p = rx.astype(jnp.float32)
    u_p = u.astype(jnp.float32)
    if n_pad != N:
        rx_p = jnp.pad(rx_p, ((0, n_pad - N), (0, 0)))
        u_p = jnp.pad(u_p, ((0, 0), (0, n_pad - N), (0, 0)), constant_values=1.0)

    # Lane-dense output: pad the states axis up to a multiple of 128.
    s_pad = 128 * pl.cdiv(n_states, 128)
    w3p = jnp.zeros((H, s_pad), jnp.float32).at[:, :n_states].set(
        w3.astype(jnp.float32))
    b3p = jnp.full((1, s_pad), -1e30, jnp.float32).at[:, :n_states].set(
        b3.astype(jnp.float32))

    # Call-constant keep probability computed once in the wrapper.
    keep_prob = jax.nn.sigmoid(dropout_logit.astype(jnp.float32))     # (1, H)

    grid_spec = pltpu.PrefetchScalarGridSpec(
        num_scalar_prefetch=0,
        grid=(n_pad // tile_n,),
        in_specs=[
            pl.BlockSpec((tile_n, d_in), lambda i: (i, 0)),      # rx
            pl.BlockSpec((E, tile_n, H), lambda i: (0, i, 0)),   # u (natural layout)
            pl.BlockSpec((d_in, H),      lambda i: (0, 0)),      # W1
            pl.BlockSpec((1, H),         lambda i: (0, 0)),      # b1
            pl.BlockSpec((H, H),         lambda i: (0, 0)),      # W2
            pl.BlockSpec((1, H),         lambda i: (0, 0)),      # b2
            pl.BlockSpec((H, s_pad),     lambda i: (0, 0)),      # W3 (padded)
            pl.BlockSpec((1, s_pad),     lambda i: (0, 0)),      # b3 (padded)
            pl.BlockSpec((1, H),         lambda i: (0, 0)),      # keep_prob
        ],
        out_specs=pl.BlockSpec((tile_n, s_pad), lambda i: (i, 0)),
    )

    out_padded = pl.pallas_call(
        _bayesian_dnn_kernel,
        out_shape=jax.ShapeDtypeStruct((n_pad, s_pad), jnp.float32),
        grid_spec=grid_spec,
        compiler_params=pltpu.CompilerParams(
            dimension_semantics=("parallel",)),
    )(rx_p, u_p, w1.astype(jnp.float32), b1.astype(jnp.float32),
      w2.astype(jnp.float32), b2.astype(jnp.float32), w3p, b3p, keep_prob)

    return out_padded[:N, :n_states]


def _reference(rx, u, w1, b1, w2, b2, w3, b3, logit):
    x1 = jax.nn.relu(rx @ w1 + b1)
    x2 = x1 @ w2 + b2
    p = jax.nn.sigmoid(logit)
    acc = 0.0
    for e in range(u.shape[0]):
        z = (u[e] < p).astype(jnp.float32)
        out = jax.nn.relu(x2 * z) @ w3 + b3
        acc = acc + jax.nn.log_softmax(out, axis=1)
    return acc / u.shape[0]


if __name__ == "__main__":
    # Module hyper-parameters (BPSK modulation -> base_rx_size = n_ant).
    n_user = 4
    n_ant = 4
    n_states = 16          # e.g. 2 ** n_user states
    hidden_size = 32
    ensemble_num = 3
    batch = 16

    base_rx_size = n_ant   # BPSK

    key = jax.random.PRNGKey(0)
    ks = jax.random.split(key, 10)

    # Deterministic synthetic parameters (Linear: y = x @ W + b, W is [in, out]).
    w1 = jax.random.normal(ks[0], (base_rx_size, hidden_size), jnp.float32) * 0.3
    b1 = jax.random.normal(ks[1], (1, hidden_size), jnp.float32) * 0.1
    w2 = jax.random.normal(ks[2], (hidden_size, hidden_size), jnp.float32) * 0.2
    b2 = jax.random.normal(ks[3], (1, hidden_size), jnp.float32) * 0.1
    w3 = jax.random.normal(ks[4], (hidden_size, n_states), jnp.float32) * 0.2
    b3 = jax.random.normal(ks[5], (1, n_states), jnp.float32) * 0.1
    dropout_logit = jax.random.uniform(ks[6], (1, hidden_size), jnp.float32)

    # Inputs: received symbols and per-ensemble dropout uniforms.
    rx = jax.random.normal(ks[7], (batch, base_rx_size), jnp.float32)
    u = jax.random.uniform(ks[8], (ensemble_num, batch, hidden_size), jnp.float32)

    log_probs = bayesian_dnn_forward(rx, u, w1, b1, w2, b2, w3, b3, dropout_logit)
    log_probs = jax.block_until_ready(log_probs)

    ref = _reference(rx, u, w1, b1, w2, b2, w3, b3, dropout_logit)
    assert log_probs.shape == (batch, n_states)
    assert jnp.allclose(log_probs, ref, atol=1e-5, rtol=1e-5), "mismatch vs reference"

    print("KERNEL_OK")
</pallas_src>

<mosaic_0001>
module attributes {stable_mosaic.version = 11 : i64} {
  func.func @_bayesian_dnn_kernel(%arg0: i32, %arg1: memref<16x4xf32, #tpu.memory_space<vmem>>, %arg2: memref<3x16x32xf32, #tpu.memory_space<vmem>>, %arg3: memref<4x32xf32, #tpu.memory_space<vmem>>, %arg4: memref<1x32xf32, #tpu.memory_space<vmem>>, %arg5: memref<32x32xf32, #tpu.memory_space<vmem>>, %arg6: memref<1x32xf32, #tpu.memory_space<vmem>>, %arg7: memref<32x128xf32, #tpu.memory_space<vmem>>, %arg8: memref<1x128xf32, #tpu.memory_space<vmem>>, %arg9: memref<1x32xf32, #tpu.memory_space<vmem>>, %arg10: memref<16x128xf32, #tpu.memory_space<vmem>>) attributes {dimension_semantics = [#tpu.dimension_semantics<parallel>], iteration_bounds = array<i64: 1>, scalar_prefetch = 0 : i64, scratch_operands = 0 : i64, tpu.core_type = #tpu.core_type<tc>, window_params = [{transform_indices = @transform_0, window_bounds = array<i64: 16, 4>}, {transform_indices = @transform_1, window_bounds = array<i64: 3, 16, 32>}, {pipeline_mode = #tpu.pipeline_mode<synchronous>, transform_indices = @transform_2, window_bounds = array<i64: 4, 32>}, {pipeline_mode = #tpu.pipeline_mode<synchronous>, transform_indices = @transform_3, window_bounds = array<i64: 1, 32>}, {pipeline_mode = #tpu.pipeline_mode<synchronous>, transform_indices = @transform_4, window_bounds = array<i64: 32, 32>}, {pipeline_mode = #tpu.pipeline_mode<synchronous>, transform_indices = @transform_5, window_bounds = array<i64: 1, 32>}, {pipeline_mode = #tpu.pipeline_mode<synchronous>, transform_indices = @transform_6, window_bounds = array<i64: 32, 128>}, {pipeline_mode = #tpu.pipeline_mode<synchronous>, transform_indices = @transform_7, window_bounds = array<i64: 1, 128>}, {pipeline_mode = #tpu.pipeline_mode<synchronous>, transform_indices = @transform_8, window_bounds = array<i64: 1, 32>}, {transform_indices = @transform_9, window_bounds = array<i64: 16, 128>}]} {
    %c0 = arith.constant 0 : index
    %c0_0 = arith.constant 0 : index
    %0 = vector.load %arg1[%c0, %c0_0] : memref<16x4xf32, #tpu.memory_space<vmem>>, vector<16x4xf32>
    %c0_1 = arith.constant 0 : index
    %c0_2 = arith.constant 0 : index
    %1 = vector.load %arg3[%c0_1, %c0_2] : memref<4x32xf32, #tpu.memory_space<vmem>>, vector<4x32xf32>
    %cst = arith.constant dense<0.000000e+00> : vector<16x32xf32>
    %2 = tpu.matmul %0, %1, %cst {dimension_numbers = #tpu.dot_dimension_numbers<[1], [0], [0], [1], [0, 0, 1, 1], [], []>} : vector<16x4xf32>, vector<4x32xf32>, vector<16x32xf32> -> vector<16x32xf32>
    %c0_3 = arith.constant 0 : index
    %c0_4 = arith.constant 0 : index
    %3 = vector.load %arg4[%c0_3, %c0_4] : memref<1x32xf32, #tpu.memory_space<vmem>>, vector<1x32xf32>
    %4 = vector.broadcast %3 : vector<1x32xf32> to vector<16x32xf32>
    %5 = arith.addf %2, %4 : vector<16x32xf32>
    %cst_5 = arith.constant 0.000000e+00 : f32
    %6 = vector.broadcast %cst_5 : f32 to vector<16x32xf32>
    %7 = arith.maximumf %5, %6 : vector<16x32xf32>
    %c0_6 = arith.constant 0 : index
    %c0_7 = arith.constant 0 : index
    %8 = vector.load %arg5[%c0_6, %c0_7] : memref<32x32xf32, #tpu.memory_space<vmem>>, vector<32x32xf32>
    %cst_8 = arith.constant dense<0.000000e+00> : vector<16x32xf32>
    %9 = tpu.matmul %7, %8, %cst_8 {dimension_numbers = #tpu.dot_dimension_numbers<[1], [0], [0], [1], [0, 0, 1, 1], [], []>} : vector<16x32xf32>, vector<32x32xf32>, vector<16x32xf32> -> vector<16x32xf32>
    %c0_9 = arith.constant 0 : index
    %c0_10 = arith.constant 0 : index
    %10 = vector.load %arg6[%c0_9, %c0_10] : memref<1x32xf32, #tpu.memory_space<vmem>>, vector<1x32xf32>
    %11 = vector.broadcast %10 : vector<1x32xf32> to vector<16x32xf32>
    %12 = arith.addf %9, %11 : vector<16x32xf32>
    %cst_11 = arith.constant 0.000000e+00 : f32
    %13 = vector.broadcast %cst_11 : f32 to vector<16x32xf32>
    %14 = arith.maximumf %12, %13 : vector<16x32xf32>
    %c0_12 = arith.constant 0 : index
    %c0_13 = arith.constant 0 : index
    %15 = vector.load %arg9[%c0_12, %c0_13] : memref<1x32xf32, #tpu.memory_space<vmem>>, vector<1x32xf32>
    %c0_14 = arith.constant 0 : index
    %c0_15 = arith.constant 0 : index
    %c0_16 = arith.constant 0 : index
    %16 = vector.load %arg2[%c0_14, %c0_15, %c0_16] : memref<3x16x32xf32, #tpu.memory_space<vmem>>, vector<1x16x32xf32>
    %17 = vector.shape_cast %16 : vector<1x16x32xf32> to vector<16x32xf32>
    %18 = vector.broadcast %15 : vector<1x32xf32> to vector<16x32xf32>
    %19 = arith.cmpf olt, %17, %18 : vector<16x32xf32>
    %cst_17 = arith.constant 0.000000e+00 : f32
    %20 = vector.broadcast %cst_17 : f32 to vector<16x32xf32>
    %21 = arith.select %19, %14, %20 : vector<16x32xi1>, vector<16x32xf32>
    %c1 = arith.constant 1 : index
    %c0_18 = arith.constant 0 : index
    %c0_19 = arith.constant 0 : index
    %22 = vector.load %arg2[%c1, %c0_18, %c0_19] : memref<3x16x32xf32, #tpu.memory_space<vmem>>, vector<1x16x32xf32>
    %23 = vector.shape_cast %22 : vector<1x16x32xf32> to vector<16x32xf32>
    %24 = vector.broadcast %15 : vector<1x32xf32> to vector<16x32xf32>
    %25 = arith.cmpf olt, %23, %24 : vector<16x32xf32>
    %cst_20 = arith.constant 0.000000e+00 : f32
    %26 = vector.broadcast %cst_20 : f32 to vector<16x32xf32>
    %27 = arith.select %25, %14, %26 : vector<16x32xi1>, vector<16x32xf32>
    %c2 = arith.constant 2 : index
    %c0_21 = arith.constant 0 : index
    %c0_22 = arith.constant 0 : index
    %28 = vector.load %arg2[%c2, %c0_21, %c0_22] : memref<3x16x32xf32, #tpu.memory_space<vmem>>, vector<1x16x32xf32>
    %29 = vector.shape_cast %28 : vector<1x16x32xf32> to vector<16x32xf32>
    %30 = vector.broadcast %15 : vector<1x32xf32> to vector<16x32xf32>
    %31 = arith.cmpf olt, %29, %30 : vector<16x32xf32>
    %cst_23 = arith.constant 0.000000e+00 : f32
    %32 = vector.broadcast %cst_23 : f32 to vector<16x32xf32>
    %33 = arith.select %31, %14, %32 : vector<16x32xi1>, vector<16x32xf32>
    %34 = tpu.concatenate %21, %27, %33 in 0 : vector<16x32xf32>, vector<16x32xf32>, vector<16x32xf32> -> vector<48x32xf32>
    %c0_24 = arith.constant 0 : index
    %c0_25 = arith.constant 0 : index
    %35 = vector.load %arg7[%c0_24, %c0_25] : memref<32x128xf32, #tpu.memory_space<vmem>>, vector<32x128xf32>
    %cst_26 = arith.constant dense<0.000000e+00> : vector<48x128xf32>
    %36 = tpu.matmul %34, %35, %cst_26 {dimension_numbers = #tpu.dot_dimension_numbers<[1], [0], [0], [1], [0, 0, 1, 1], [], []>} : vector<48x32xf32>, vector<32x128xf32>, vector<48x128xf32> -> vector<48x128xf32>
    %c0_27 = arith.constant 0 : index
    %c0_28 = arith.constant 0 : index
    %37 = vector.load %arg8[%c0_27, %c0_28] : memref<1x128xf32, #tpu.memory_space<vmem>>, vector<1x128xf32>
    %38 = vector.broadcast %37 : vector<1x128xf32> to vector<48x128xf32>
    %39 = arith.addf %36, %38 : vector<48x128xf32>
    %cst_29 = arith.constant dense<0xFF800000> : vector<48xf32>
    %40 = vector.multi_reduction <maximumf>, %39, %cst_29 [1] : vector<48x128xf32> to vector<48xf32>
    %41 = vector.shape_cast %40 : vector<48xf32> to vector<48x1xf32>
    %42 = vector.broadcast %41 : vector<48x1xf32> to vector<48x128xf32>
    %43 = arith.subf %39, %42 : vector<48x128xf32>
    %44 = math.exp %43 : vector<48x128xf32>
    %cst_30 = arith.constant dense<0.000000e+00> : vector<48xf32>
    %45 = vector.multi_reduction <add>, %44, %cst_30 [1] : vector<48x128xf32> to vector<48xf32>
    %46 = vector.shape_cast %45 : vector<48xf32> to vector<48x1xf32>
    %47 = math.log %46 : vector<48x1xf32>
    %48 = arith.addf %47, %41 : vector<48x1xf32>
    %49 = vector.broadcast %48 : vector<48x1xf32> to vector<48x128xf32>
    %50 = arith.subf %39, %49 : vector<48x128xf32>
    %51 = vector.extract_strided_slice %50 {offsets = [0, 0], sizes = [16, 128], strides = [1, 1]} : vector<48x128xf32> to vector<16x128xf32>
    %52 = vector.extract_strided_slice %50 {offsets = [16, 0], sizes = [16, 128], strides = [1, 1]} : vector<48x128xf32> to vector<16x128xf32>
    %53 = arith.addf %51, %52 : vector<16x128xf32>
    %54 = vector.extract_strided_slice %50 {offsets = [32, 0], sizes = [16, 128], strides = [1, 1]} : vector<48x128xf32> to vector<16x128xf32>
    %55 = arith.addf %53, %54 : vector<16x128xf32>
    %cst_31 = arith.constant 0.333333343 : f32
    %56 = vector.broadcast %cst_31 : f32 to vector<16x128xf32>
    %57 = arith.mulf %55, %56 : vector<16x128xf32>
    %c0_32 = arith.constant 0 : index
    %c0_33 = arith.constant 0 : index
    %58 = vector.load %arg10[%c0_32, %c0_33] : memref<16x128xf32, #tpu.memory_space<vmem>>, vector<16x128xf32>
    tpu.vector_store %arg10[%c0_32, %c0_33], %57 {strides = array<i32>} : memref<16x128xf32, #tpu.memory_space<vmem>>, vector<16x128xf32>,
    return
  }
  func.func @transform_0(%arg0: i32) -> (i32, i32) {
    %c0_i32 = arith.constant 0 : i32
    %c0_i32_0 = arith.constant 0 : i32
    return %arg0, %c0_i32 : i32, i32
  }
  func.func @transform_1(%arg0: i32) -> (i32, i32, i32) {
    %c0_i32 = arith.constant 0 : i32
    %c0_i32_0 = arith.constant 0 : i32
    %c0_i32_1 = arith.constant 0 : i32
    return %c0_i32, %arg0, %c0_i32_0 : i32, i32, i32
  }
  func.func @transform_2(%arg0: i32) -> (i32, i32) {
    %c0_i32 = arith.constant 0 : i32
    %c0_i32_0 = arith.constant 0 : i32
    %c0_i32_1 = arith.constant 0 : i32
    return %c0_i32, %c0_i32_0 : i32, i32
  }
  func.func @transform_3(%arg0: i32) -> (i32, i32) {
    %c0_i32 = arith.constant 0 : i32
    %c0_i32_0 = arith.constant 0 : i32
    %c0_i32_1 = arith.constant 0 : i32
    return %c0_i32, %c0_i32_0 : i32, i32
  }
  func.func @transform_4(%arg0: i32) -> (i32, i32) {
    %c0_i32 = arith.constant 0 : i32
    %c0_i32_0 = arith.constant 0 : i32
    %c0_i32_1 = arith.constant 0 : i32
    return %c0_i32, %c0_i32_0 : i32, i32
  }
  func.func @transform_5(%arg0: i32) -> (i32, i32) {
    %c0_i32 = arith.constant 0 : i32
    %c0_i32_0 = arith.constant 0 : i32
    %c0_i32_1 = arith.constant 0 : i32
    return %c0_i32, %c0_i32_0 : i32, i32
  }
  func.func @transform_6(%arg0: i32) -> (i32, i32) {
    %c0_i32 = arith.constant 0 : i32
    %c0_i32_0 = arith.constant 0 : i32
    %c0_i32_1 = arith.constant 0 : i32
    return %c0_i32, %c0_i32_0 : i32, i32
  }
  func.func @transform_7(%arg0: i32) -> (i32, i32) {
    %c0_i32 = arith.constant 0 : i32
    %c0_i32_0 = arith.constant 0 : i32
    %c0_i32_1 = arith.constant 0 : i32
    return %c0_i32, %c0_i32_0 : i32, i32
  }
  func.func @transform_8(%arg0: i32) -> (i32, i32) {
    %c0_i32 = arith.constant 0 : i32
    %c0_i32_0 = arith.constant 0 : i32
    %c0_i32_1 = arith.constant 0 : i32
    return %c0_i32, %c0_i32_0 : i32, i32
  }
  func.func @transform_9(%arg0: i32) -> (i32, i32) {
    %c0_i32 = arith.constant 0 : i32
    %c0_i32_0 = arith.constant 0 : i32
    return %arg0, %c0_i32 : i32, i32
  }
}

</mosaic_0001>

<llo_original>
// kernel: tpu_custom_call.1
$region0: #{tpu_custom_call.1}
  #allocation0 [shape = 'u32[]', space=smem, size = 0x4, offset = 0x4, fixed_abs, tag = 'smem constant byte address 0x4 - core index']
  #allocation1 [shape = 'u32[144,128]{1,0:T(1,128)}', space=vmem, size = 0x12000, scoped, tag = 'internal scratch']
  %s0 = inlined_call_operand.vmem [shape: f32[16,4], index: 0, kind: input, shape index: {}]
  %s1 = inlined_call_operand.hbm [shape: f32[3,16,32], index: 1, kind: input, shape index: {}]
  %s2 = inlined_call_operand.hbm [shape: f32[4,32], index: 2, kind: input, shape index: {}]
  %s3 = inlined_call_operand.vmem [shape: f32[1,32], index: 3, kind: input, shape index: {}]
  %s4 = inlined_call_operand.vmem [shape: f32[32,32], index: 4, kind: input, shape index: {}]
  %s5 = inlined_call_operand.vmem [shape: f32[1,32], index: 5, kind: input, shape index: {}]
  %s6 = inlined_call_operand.hbm [shape: f32[32,128], index: 6, kind: input, shape index: {}]
  %s7 = inlined_call_operand.vmem [shape: f32[1,128], index: 7, kind: input, shape index: {}]
  %s8 = inlined_call_operand.vmem [shape: f32[1,32], index: 8, kind: input, shape index: {}]
  %s9 = inlined_call_operand.hbm [shape: f32[16,128], index: 9, kind: output, shape index: {}]
  %s10 = sld [smem:[#allocation0]]
  $region58: #{tpu_custom_call.1} parent=0
    _
  %s12 = ssub.s32 1, %s10
  %s13 = scalar_select 0, %s12, %s10
  $region1: #{tpu_custom_call.1} parent=0
    #allocation2 [shape = 'u8[24576]{0}', space=vmem, size = 0x6000, scoped, tag = 'input window, operand 1, single buffered']
    #allocation3 [shape = 's32[1]{0}', space=sflag, size = 0x4, scoped, tag = 'scoped memory for tpu_custom_call.1']
    #allocation4 [shape = 's32[1]{0}', space=sflag, size = 0x4, scoped, tag = 'scoped memory for tpu_custom_call.1']
    #allocation5 [shape = 'u8[2048]{0}', space=vmem, size = 0x800, scoped, tag = 'input window, operand 2, single buffered']
    #allocation6 [shape = 's32[1]{0}', space=sflag, size = 0x4, scoped, tag = 'scoped memory for tpu_custom_call.1']
    #allocation7 [shape = 'u8[16384]{0}', space=vmem, size = 0x4000, scoped, tag = 'input window, operand 6, single buffered']
    #allocation8 [shape = 'u8[8192]{0}', space=vmem, size = 0x2000, scoped, tag = 'output window, operand 0, single buffered']
    %14 = vsyncpa [#allocation3], 0
    %15 = vsyncpa [#allocation6], 0
    %16 = vsyncpa [#allocation4], 0
    // Predicated region
    $region2: #{tpu_custom_call.1} parent=1 // pred_check
      _
    $region3: #{tpu_custom_call.1} parent=1 // pred_check_branch
      %18 = sbr.rel (0) target = $region5
    $region4: #{tpu_custom_call.1} parent=1 // pred_region
      _
    $region5: #{tpu_custom_call.1} parent=1 // pred_fallthru
      _
    // Predicated region
    $region6: #{tpu_custom_call.1} parent=1 // pred_check
      _
    $region7: #{tpu_custom_call.1} parent=1 // pred_check_branch
      %20 = sbr.rel (0) target = $region9
    $region8: #{tpu_custom_call.1} parent=1 // pred_region
      %s22 = ssub.s32 768, 768
      %23 = vsyncadd [#allocation3], %s22
      %s24 = sshll.u32 [#allocation2], 4
      %s25 = int_to_ptr.vmem [resolvable:$true] %s24
      %30 = dma.hbm_to_vmem [thread:$0]  %s1, 768, %s25, [#allocation3], 128, 128, 8
    $region9: #{tpu_custom_call.1} parent=1 // pred_fallthru
      _
    // Predicated region
    $region10: #{tpu_custom_call.1} parent=1 // pred_check
      _
    $region11: #{tpu_custom_call.1} parent=1 // pred_check_branch
      %32 = sbr.rel (0) target = $region13
    $region12: #{tpu_custom_call.1} parent=1 // pred_region
      %s34 = ssub.s32 64, 64
      %35 = vsyncadd [#allocation6], %s34
      %s37 = sshll.u32 [#allocation5], 4
      %s38 = int_to_ptr.vmem [resolvable:$true] %s37
      %40 = dma.hbm_to_vmem [thread:$0]  %s2, 64, %s38, [#allocation6]
    $region13: #{tpu_custom_call.1} parent=1 // pred_fallthru
      _
    // Predicated region
    $region14: #{tpu_custom_call.1} parent=1 // pred_check
      _
    $region15: #{tpu_custom_call.1} parent=1 // pred_check_branch
      %42 = sbr.rel (0) target = $region17
    $region16: #{tpu_custom_call.1} parent=1 // pred_region
      _
    $region17: #{tpu_custom_call.1} parent=1 // pred_fallthru
      _
    // Predicated region
    $region18: #{tpu_custom_call.1} parent=1 // pred_check
      _
    $region19: #{tpu_custom_call.1} parent=1 // pred_check_branch
      %44 = sbr.rel (0) target = $region21
    $region20: #{tpu_custom_call.1} parent=1 // pred_region
      _
    $region21: #{tpu_custom_call.1} parent=1 // pred_fallthru
      _
    // Predicated region
    $region22: #{tpu_custom_call.1} parent=1 // pred_check
      _
    $region23: #{tpu_custom_call.1} parent=1 // pred_check_branch
      %46 = sbr.rel (0) target = $region25
    $region24: #{tpu_custom_call.1} parent=1 // pred_region
      _
    $region25: #{tpu_custom_call.1} parent=1 // pred_fallthru
      _
    // Predicated region
    $region26: #{tpu_custom_call.1} parent=1 // pred_check
      _
    $region27: #{tpu_custom_call.1} parent=1 // pred_check_branch
      %48 = sbr.rel (0) target = $region29
    $region28: #{tpu_custom_call.1} parent=1 // pred_region
      %s50 = ssub.s32 512, 512
      %51 = vsyncadd [#allocation6], %s50
      %s52 = sshll.u32 [#allocation7], 4
      %s53 = int_to_ptr.vmem [resolvable:$true] %s52
      %58 = dma.hbm_to_vmem [thread:$0]  %s6, 512, %s53, [#allocation6], 128, 128, 8
    $region29: #{tpu_custom_call.1} parent=1 // pred_fallthru
      _
    // Predicated region
    $region30: #{tpu_custom_call.1} parent=1 // pred_check
      _
    $region31: #{tpu_custom_call.1} parent=1 // pred_check_branch
      %60 = sbr.rel (0) target = $region33
    $region32: #{tpu_custom_call.1} parent=1 // pred_region
      _
    $region33: #{tpu_custom_call.1} parent=1 // pred_fallthru
      _
    // Predicated region
    $region34: #{tpu_custom_call.1} parent=1 // pred_check
      _
    $region35: #{tpu_custom_call.1} parent=1 // pred_check_branch
      %62 = sbr.rel (0) target = $region37
    $region36: #{tpu_custom_call.1} parent=1 // pred_region
      _
    $region37: #{tpu_custom_call.1} parent=1 // pred_fallthru
      _
    // Predicated region
    $region38: #{tpu_custom_call.1} parent=1 // pred_check
      _
    $region39: #{tpu_custom_call.1} parent=1 // pred_check_branch
      %64 = sbr.rel (0) target = $region41
    $region40: #{tpu_custom_call.1} parent=1 // pred_region
      %65 = dma.done [#allocation3], 768
    $region41: #{tpu_custom_call.1} parent=1 // pred_fallthru
      _
    // Predicated region
    $region42: #{tpu_custom_call.1} parent=1 // pred_check
      _
    $region43: #{tpu_custom_call.1} parent=1 // pred_check_branch
      %67 = sbr.rel (0) target = $region45
    $region44: #{tpu_custom_call.1} parent=1 // pred_region
      %68 = dma.done [#allocation6], 64
    $region45: #{tpu_custom_call.1} parent=1 // pred_fallthru
      _
    // Predicated region
    $region46: #{tpu_custom_call.1} parent=1 // pred_check
      _
    $region47: #{tpu_custom_call.1} parent=1 // pred_check_branch
      %70 = sbr.rel (0) target = $region49
    $region48: #{tpu_custom_call.1} parent=1 // pred_region
      %71 = dma.done [#allocation6], 512
    $region49: #{tpu_custom_call.1} parent=1 // pred_fallthru
      _
    %v72 = vld [vmem:[%s0] sm:$0xff]
    %v73 = vld [vmem:[%s0 + $0x8] sm:$0xff]
    %v74 = vld [vmem:[#allocation5] sm:$0xf]
    %v75 = vld [vmem:[%s3] sm:$0x1]
    %v77 = vlaneseq
    %v78 = vshrl.u32 %v77, 7
    %v79 = vsub.s32 0, %v78
    %v80 = vrot.slane %v75, %v79
    %vm82 = vcmask 31744
    %v84 = vsel %vm82, %v72, 0
    %v87 = vsel %vm82, %v73, 0
    %vm89 = vcmask 1043456
    %v91 = vsel %vm89, %v74, 0
    %93 = vmatprep.subr.mxu0 0.0
    %94 = vmatpush1.msra.mxu0 %v91
    %95 = vmatprep.subr.mxu0 0.0
    %96 = vmatpush1.msra.mxu0 0.0
    %97 = vmatprep.subr.mxu0 0.0
    %98 = vmatpush1.msra.mxu0 0.0
    %99 = vmatprep.subr.mxu0 0.0
    %100 = vmatpush1.msra.mxu0 0.0
    %101 = vmatprep.subr.mxu0 0.0
    %102 = vmatpush1.msra.mxu0 0.0
    %103 = vmatprep.subr.mxu0 0.0
    %104 = vmatpush1.msra.mxu0 0.0
    %105 = vmatprep.subr.mxu0 0.0
    %106 = vmatpush1.msra.mxu0 0.0
    %107 = vmatprep.subr.mxu0 0.0
    %108 = vmatpush1.msra.mxu0 0.0
    %109 = vmatprep.subr.mxu0 0.0
    %110 = vmatpush1.msra.mxu0 0.0
    %111 = vmatprep.subr.mxu0 0.0
    %112 = vmatpush1.msra.mxu0 0.0
    %113 = vmatprep.subr.mxu0 0.0
    %114 = vmatpush1.msra.mxu0 0.0
    %115 = vmatprep.subr.mxu0 0.0
    %116 = vmatpush1.msra.mxu0 0.0
    %117 = vmatprep.subr.mxu0 0.0
    %118 = vmatpush1.msra.mxu0 0.0
    %119 = vmatprep.subr.mxu0 0.0
    %120 = vmatpush1.msra.mxu0 0.0
    %121 = vmatprep.subr.mxu0 0.0
    %122 = vmatpush1.msra.mxu0 0.0
    %123 = vmatprep.subr.mxu0 0.0
    %124 = vmatpush1.msra.mxu0 0.0
    %125 = vmatprep.subr.mxu0 0.0
    %126 = vmatpush1.msra.mxu0 0.0
    %127 = vmatprep.subr.mxu0 0.0
    %128 = vmatpush1.msra.mxu0 0.0
    %129 = vmatprep.subr.mxu0 0.0
    %130 = vmatpush1.msra.mxu0 0.0
    %131 = vmatprep.subr.mxu0 0.0
    %132 = vmatpush1.msra.mxu0 0.0
    %133 = vmatprep.subr.mxu0 0.0
    %134 = vmatpush1.msra.mxu0 0.0
    %135 = vmatprep.subr.mxu0 0.0
    %136 = vmatpush1.msra.mxu0 0.0
    %137 = vmatprep.subr.mxu0 0.0
    %138 = vmatpush1.msra.mxu0 0.0
    %139 = vmatprep.subr.mxu0 0.0
    %140 = vmatpush1.msra.mxu0 0.0
    %141 = vmatprep.subr.mxu0 0.0
    %142 = vmatpush1.msra.mxu0 0.0
    %143 = vmatprep.subr.mxu0 0.0
    %144 = vmatpush1.msra.mxu0 0.0
    %145 = vmatprep.subr.mxu0 0.0
    %146 = vmatpush1.msra.mxu0 0.0
    %147 = vmatprep.subr.mxu0 0.0
    %148 = vmatpush1.msra.mxu0 0.0
    %149 = vmatprep.subr.mxu0 0.0
    %150 = vmatpush1.msra.mxu0 0.0
    %151 = vmatprep.subr.mxu0 0.0
    %152 = vmatpush1.msra.mxu0 0.0
    %153 = vmatprep.subr.mxu0 0.0
    %154 = vmatpush1.msra.mxu0 0.0
    %155 = vmatprep.subr.mxu0 0.0
    %156 = vmatpush1.msra.mxu0 0.0
    %157 = vmatprep.mubr.f32.mxu0 0.0
    %158 = vmatmul.mubr.f32.gmra.mrb[0].mxu0 %v84
    %v159 = vpop.f32.mrb[0].mxu0
    %v160 = vadd.f32 %v80, %v159
    %v161 = vpop.f32.mrb[0].mxu0
    %162 = vmatprep.mubr.f32.mxu0 0.0
    %163 = vmatmul.mubr.f32.gmra.mrb[0].mxu0 %v87
    %v164 = vpop.f32.mrb[0].mxu0
    %v165 = vadd.f32 %v80, %v164
    %v166 = vpop.f32.mrb[0].mxu0
    %167 = vdwg.mxu0
    %v168 = vmax.f32 %v160, 0.0
    %v169 = vmax.f32 %v165, 0.0
    %v170 = vld [vmem:[%s4] sm:$0xff]
    %v171 = vld [vmem:[%s4 + $0x8] sm:$0xff]
    %v172 = vld [vmem:[%s4 + $0x10] sm:$0xff]
    %v173 = vld [vmem:[%s4 + $0x18] sm:$0xff]
    %v174 = vld [vmem:[%s5] sm:$0x1]
    %v176 = vlaneseq
    %v177 = vshrl.u32 %v176, 7
    %v178 = vsub.s32 0, %v177
    %v179 = vrot.slane %v174, %v178
    %vm181 = vcmask 261120
    %v183 = vsel %vm181, %v168, 0
    %v186 = vsel %vm181, %v169, 0
    %188 = vmatprep.subr.mxu0 0.0
    %189 = vmatpush1.msra.mxu0 %v170
    %190 = vmatprep.subr.mxu0 0.0
    %191 = vmatpush1.msra.mxu0 %v171
    %192 = vmatprep.subr.mxu0 0.0
    %193 = vmatpush1.msra.mxu0 %v172
    %194 = vmatprep.subr.mxu0 0.0
    %195 = vmatpush1.msra.mxu0 %v173
    %196 = vmatprep.subr.mxu0 0.0
    %197 = vmatpush1.msra.mxu0 0.0
    %198 = vmatprep.subr.mxu0 0.0
    %199 = vmatpush1.msra.mxu0 0.0
    %200 = vmatprep.subr.mxu0 0.0
    %201 = vmatpush1.msra.mxu0 0.0
    %202 = vmatprep.subr.mxu0 0.0
    %203 = vmatpush1.msra.mxu0 0.0
    %204 = vmatprep.subr.mxu0 0.0
    %205 = vmatpush1.msra.mxu0 0.0
    %206 = vmatprep.subr.mxu0 0.0
    %207 = vmatpush1.msra.mxu0 0.0
    %208 = vmatprep.subr.mxu0 0.0
    %209 = vmatpush1.msra.mxu0 0.0
    %210 = vmatprep.subr.mxu0 0.0
    %211 = vmatpush1.msra.mxu0 0.0
    %212 = vmatprep.subr.mxu0 0.0
    %213 = vmatpush1.msra.mxu0 0.0
    %214 = vmatprep.subr.mxu0 0.0
    %215 = vmatpush1.msra.mxu0 0.0
    %216 = vmatprep.subr.mxu0 0.0
    %217 = vmatpush1.msra.mxu0 0.0
    %218 = vmatprep.subr.mxu0 0.0
    %219 = vmatpush1.msra.mxu0 0.0
    %220 = vmatprep.subr.mxu0 0.0
    %221 = vmatpush1.msra.mxu0 0.0
    %222 = vmatprep.subr.mxu0 0.0
    %223 = vmatpush1.msra.mxu0 0.0
    %224 = vmatprep.subr.mxu0 0.0
    %225 = vmatpush1.msra.mxu0 0.0
    %226 = vmatprep.subr.mxu0 0.0
    %227 = vmatpush1.msra.mxu0 0.0
    %228 = vmatprep.subr.mxu0 0.0
    %229 = vmatpush1.msra.mxu0 0.0
    %230 = vmatprep.subr.mxu0 0.0
    %231 = vmatpush1.msra.mxu0 0.0
    %232 = vmatprep.subr.mxu0 0.0
    %233 = vmatpush1.msra.mxu0 0.0
    %234 = vmatprep.subr.mxu0 0.0
    %235 = vmatpush1.msra.mxu0 0.0
    %236 = vmatprep.subr.mxu0 0.0
    %237 = vmatpush1.msra.mxu0 0.0
    %238 = vmatprep.subr.mxu0 0.0
    %239 = vmatpush1.msra.mxu0 0.0
    %240 = vmatprep.subr.mxu0 0.0
    %241 = vmatpush1.msra.mxu0 0.0
    %242 = vmatprep.subr.mxu0 0.0
    %243 = vmatpush1.msra.mxu0 0.0
    %244 = vmatprep.subr.mxu0 0.0
    %245 = vmatpush1.msra.mxu0 0.0
    %246 = vmatprep.subr.mxu0 0.0
    %247 = vmatpush1.msra.mxu0 0.0
    %248 = vmatprep.subr.mxu0 0.0
    %249 = vmatpush1.msra.mxu0 0.0
    %250 = vmatprep.subr.mxu0 0.0
    %251 = vmatpush1.msra.mxu0 0.0
    %252 = vmatprep.mubr.f32.mxu0 0.0
    %253 = vmatmul.mubr.f32.gmra.mrb[0].mxu0 %v183
    %v254 = vpop.f32.mrb[0].mxu0
    %v255 = vadd.f32 %v179, %v254
    %v256 = vpop.f32.mrb[0].mxu0
    %257 = vmatprep.mubr.f32.mxu0 0.0
    %258 = vmatmul.mubr.f32.gmra.mrb[0].mxu0 %v186
    %v259 = vpop.f32.mrb[0].mxu0
    %v260 = vadd.f32 %v179, %v259
    %v261 = vpop.f32.mrb[0].mxu0
    %262 = vdwg.mxu0
    %v263 = vmax.f32 %v255, 0.0
    %v264 = vmax.f32 %v260, 0.0
    %v265 = vld [vmem:[%s8] sm:$0x1]
    %v266 = vld [vmem:[#allocation2] sm:$0xff]
    %v267 = vld [vmem:[#allocation2 + $0x8] sm:$0xff]
    %v269 = vlaneseq
    %v270 = vshrl.u32 %v269, 7
    %v271 = vsub.s32 0, %v270
    %v272 = vrot.slane %v265, %v271
    %vm274 = vcmp.lt.f32.partialorder %v266, %v272
    %vm275 = vcmp.lt.f32.partialorder %v267, %v272
    %v276 = vsel %vm274, %v263, 0.0
    %v277 = vsel %vm275, %v264, 0.0
    %s278 = scalar_lea.vmem [#allocation2], 16
    %v279 = vld [vmem:[%s278] sm:$0xff]
    %v280 = vld [vmem:[%s278 + $0x8] sm:$0xff]
    %vm281 = vcmp.lt.f32.partialorder %v279, %v272
    %vm282 = vcmp.lt.f32.partialorder %v280, %v272
    %v283 = vsel %vm281, %v263, 0.0
    %v284 = vsel %vm282, %v264, 0.0
    %s285 = scalar_lea.vmem [#allocation2], 32
    %v286 = vld [vmem:[%s285] sm:$0xff]
    %v287 = vld [vmem:[%s285 + $0x8] sm:$0xff]
    %vm288 = vcmp.lt.f32.partialorder %v286, %v272
    %vm289 = vcmp.lt.f32.partialorder %v287, %v272
    %v290 = vsel %vm288, %v263, 0.0
    %v291 = vsel %vm289, %v264, 0.0
    %v292 = vld [vmem:[#allocation7] sm:$0xff]
    %v293 = vld [vmem:[#allocation7 + $0x8] sm:$0xff]
    %v294 = vld [vmem:[#allocation7 + $0x10] sm:$0xff]
    %v295 = vld [vmem:[#allocation7 + $0x18] sm:$0xff]
    %v296 = vld [vmem:[%s7] sm:$0x1]
    %v298 = vlaneseq
    %v299 = vshrl.u32 %v298, 7
    %v300 = vsub.s32 0, %v299
    %v301 = vrot.slane %v296, %v300
    %v304 = vsel %vm181, %v276, 0
    %v307 = vsel %vm181, %v277, 0
    %v310 = vsel %vm181, %v283, 0
    %v313 = vsel %vm181, %v284, 0
    %v316 = vsel %vm181, %v290, 0
    %v319 = vsel %vm181, %v291, 0
    %321 = vmatprep.subr.mxu0 0.0
    %322 = vmatpush1.msra.mxu0 %v292
    %323 = vmatprep.subr.mxu0 0.0
    %324 = vmatpush1.msra.mxu0 %v293
    %325 = vmatprep.subr.mxu0 0.0
    %326 = vmatpush1.msra.mxu0 %v294
    %327 = vmatprep.subr.mxu0 0.0
    %328 = vmatpush1.msra.mxu0 %v295
    %329 = vmatprep.subr.mxu0 0.0
    %330 = vmatpush1.msra.mxu0 0.0
    %331 = vmatprep.subr.mxu0 0.0
    %332 = vmatpush1.msra.mxu0 0.0
    %333 = vmatprep.subr.mxu0 0.0
    %334 = vmatpush1.msra.mxu0 0.0
    %335 = vmatprep.subr.mxu0 0.0
    %336 = vmatpush1.msra.mxu0 0.0
    %337 = vmatprep.subr.mxu0 0.0
    %338 = vmatpush1.msra.mxu0 0.0
    %339 = vmatprep.subr.mxu0 0.0
    %340 = vmatpush1.msra.mxu0 0.0
    %341 = vmatprep.subr.mxu0 0.0
    %342 = vmatpush1.msra.mxu0 0.0
    %343 = vmatprep.subr.mxu0 0.0
    %344 = vmatpush1.msra.mxu0 0.0
    %345 = vmatprep.subr.mxu0 0.0
    %346 = vmatpush1.msra.mxu0 0.0
    %347 = vmatprep.subr.mxu0 0.0
    %348 = vmatpush1.msra.mxu0 0.0
    %349 = vmatprep.subr.mxu0 0.0
    %350 = vmatpush1.msra.mxu0 0.0
    %351 = vmatprep.subr.mxu0 0.0
    %352 = vmatpush1.msra.mxu0 0.0
    %353 = vmatprep.subr.mxu0 0.0
    %354 = vmatpush1.msra.mxu0 0.0
    %355 = vmatprep.subr.mxu0 0.0
    %356 = vmatpush1.msra.mxu0 0.0
    %357 = vmatprep.subr.mxu0 0.0
    %358 = vmatpush1.msra.mxu0 0.0
    %359 = vmatprep.subr.mxu0 0.0
    %360 = vmatpush1.msra.mxu0 0.0
    %361 = vmatprep.subr.mxu0 0.0
    %362 = vmatpush1.msra.mxu0 0.0
    %363 = vmatprep.subr.mxu0 0.0
    %364 = vmatpush1.msra.mxu0 0.0
    %365 = vmatprep.subr.mxu0 0.0
    %366 = vmatpush1.msra.mxu0 0.0
    %367 = vmatprep.subr.mxu0 0.0
    %368 = vmatpush1.msra.mxu0 0.0
    %369 = vmatprep.subr.mxu0 0.0
    %370 = vmatpush1.msra.mxu0 0.0
    %371 = vmatprep.subr.mxu0 0.0
    %372 = vmatpush1.msra.mxu0 0.0
    %373 = vmatprep.subr.mxu0 0.0
    %374 = vmatpush1.msra.mxu0 0.0
    %375 = vmatprep.subr.mxu0 0.0
    %376 = vmatpush1.msra.mxu0 0.0
    %377 = vmatprep.subr.mxu0 0.0
    %378 = vmatpush1.msra.mxu0 0.0
    %379 = vmatprep.subr.mxu0 0.0
    %380 = vmatpush1.msra.mxu0 0.0
    %381 = vmatprep.subr.mxu0 0.0
    %382 = vmatpush1.msra.mxu0 0.0
    %383 = vmatprep.subr.mxu0 0.0
    %384 = vmatpush1.msra.mxu0 0.0
    %385 = vmatprep.mubr.f32.mxu0 0.0
    %386 = vmatmul.mubr.f32.gmra.mrb[0].mxu0 %v304
    %v387 = vpop.f32.mrb[0].mxu0
    %v388 = vadd.f32 %v301, %v387
    %v389 = vpop.f32.mrb[0].mxu0
    %390 = vmatprep.mubr.f32.mxu0 0.0
    %391 = vmatmul.mubr.f32.gmra.mrb[0].mxu0 %v307
    %v392 = vpop.f32.mrb[0].mxu0
    %v393 = vadd.f32 %v301, %v392
    %v394 = vpop.f32.mrb[0].mxu0
    %395 = vmatprep.mubr.f32.mxu0 0.0
    %396 = vmatmul.mubr.f32.gmra.mrb[0].mxu0 %v310
    %v397 = vpop.f32.mrb[0].mxu0
    %v398 = vadd.f32 %v301, %v397
    %v399 = vpop.f32.mrb[0].mxu0
    %400 = vmatprep.mubr.f32.mxu0 0.0
    %401 = vmatmul.mubr.f32.gmra.mrb[0].mxu0 %v313
    %v402 = vpop.f32.mrb[0].mxu0
    %v403 = vadd.f32 %v301, %v402
    %v404 = vpop.f32.mrb[0].mxu0
    %405 = vmatprep.mubr.f32.mxu0 0.0
    %406 = vmatmul.mubr.f32.gmra.mrb[0].mxu0 %v316
    %v407 = vpop.f32.mrb[0].mxu0
    %v408 = vadd.f32 %v301, %v407
    %v409 = vpop.f32.mrb[0].mxu0
    %410 = vmatprep.mubr.f32.mxu0 0.0
    %411 = vmatmul.mubr.f32.gmra.mrb[0].mxu0 %v319
    %v412 = vpop.f32.mrb[0].mxu0
    %v413 = vadd.f32 %v301, %v412
    %v414 = vpop.f32.mrb[0].mxu0
    %415 = vdwg.mxu0
    %416 = vmax.xlane.f32.xlu0 %v388
    %v417 = vpop.xlane.xlu0 %416
    %418 = vmax.xlane.f32.xlu0 %v393
    %v419 = vpop.xlane.xlu0 %418
    %420 = vmax.xlane.f32.xlu0 %v398
    %v421 = vpop.xlane.xlu0 %420
    %422 = vmax.xlane.f32.xlu0 %v403
    %v423 = vpop.xlane.xlu0 %422
    %424 = vmax.xlane.f32.xlu0 %v408
    %v425 = vpop.xlane.xlu0 %424
    %426 = vmax.xlane.f32.xlu0 %v413
    %v427 = vpop.xlane.xlu0 %426
    %v428 = vsub.f32 %v388, %v417
    %v429 = vsub.f32 %v393, %v419
    %v430 = vsub.f32 %v398, %v421
    %v431 = vsub.f32 %v403, %v423
    %v432 = vsub.f32 %v408, %v425
    %v433 = vsub.f32 %v413, %v427
    %v434 = vmul.f32 %v428, 1.442695
    %v435 = vpow.pop %v434
    %v436 = vmul.f32 %v429, 1.442695
    %v437 = vpow.pop %v436
    %v438 = vmul.f32 %v430, 1.442695
    %v439 = vpow.pop %v438
    %v440 = vmul.f32 %v431, 1.442695
    %v441 = vpow.pop %v440
    %v442 = vmul.f32 %v432, 1.442695
    %v443 = vpow.pop %v442
    %v444 = vmul.f32 %v433, 1.442695
    %v445 = vpow.pop %v444
    %446 = vadd.xlane.f32.xlu0 %v435
    %v447 = vpop.xlane.xlu0 %446
    %448 = vadd.xlane.f32.xlu0 %v437
    %v449 = vpop.xlane.xlu0 %448
    %450 = vadd.xlane.f32.xlu0 %v439
    %v451 = vpop.xlane.xlu0 %450
    %452 = vadd.xlane.f32.xlu0 %v441
    %v453 = vpop.xlane.xlu0 %452
    %454 = vadd.xlane.f32.xlu0 %v443
    %v455 = vpop.xlane.xlu0 %454
    %456 = vadd.xlane.f32.xlu0 %v445
    %v457 = vpop.xlane.xlu0 %456
    %v458 = vlog2.pop %v447
    %v459 = vmul.f32 %v458, 0.6931472
    %v460 = vlog2.pop %v449
    %v461 = vmul.f32 %v460, 0.6931472
    %v462 = vlog2.pop %v451
    %v463 = vmul.f32 %v462, 0.6931472
    %v464 = vlog2.pop %v453
    %v465 = vmul.f32 %v464, 0.6931472
    %v466 = vlog2.pop %v455
    %v467 = vmul.f32 %v466, 0.6931472
    %v468 = vlog2.pop %v457
    %v469 = vmul.f32 %v468, 0.6931472
    %v470 = vadd.f32 %v459, %v417
    %v471 = vadd.f32 %v461, %v419
    %v472 = vadd.f32 %v463, %v421
    %v473 = vadd.f32 %v465, %v423
    %v474 = vadd.f32 %v467, %v425
    %v475 = vadd.f32 %v469, %v427
    %v476 = vsub.f32 %v388, %v470
    %v477 = vsub.f32 %v393, %v471
    %v478 = vsub.f32 %v398, %v472
    %v479 = vsub.f32 %v403, %v473
    %v480 = vsub.f32 %v408, %v474
    %v481 = vsub.f32 %v413, %v475
    %v482 = vadd.f32 %v476, %v478
    %v483 = vadd.f32 %v477, %v479
    %v484 = vadd.f32 %v482, %v480
    %v485 = vadd.f32 %v483, %v481
    %v486 = vmul.f32 %v484, 0.33333334
    %v487 = vmul.f32 %v485, 0.33333334
    %488 = vst [vmem:[#allocation8] sm:$0xff] %v486
    %489 = vst [vmem:[#allocation8 + $0x8] sm:$0xff] %v487
    // Predicated region
    $region50: #{tpu_custom_call.1} parent=1 // pred_check
      _
    $region51: #{tpu_custom_call.1} parent=1 // pred_check_branch
      %491 = sbr.rel (0) target = $region53
    $region52: #{tpu_custom_call.1} parent=1 // pred_region
      %s493 = ssub.s32 256, 256
      %494 = vsyncadd [#allocation4], %s493
      %s495 = sshll.u32 [#allocation8], 4
      %s496 = int_to_ptr.vmem [resolvable:$true] %s495
      %501 = dma.vmem_to_hbm [thread:$0]  %s496, 256, %s9, [#allocation4], 128, 128, 8
    $region53: #{tpu_custom_call.1} parent=1 // pred_fallthru
      _
    // Predicated region
    $region54: #{tpu_custom_call.1} parent=1 // pred_check
      _
    $region55: #{tpu_custom_call.1} parent=1 // pred_check_branch
      %503 = sbr.rel (0) target = $region57
    $region56: #{tpu_custom_call.1} parent=1 // pred_region
      %504 = dma.done [#allocation4], 256
    $region57: #{tpu_custom_call.1} parent=1 // pred_fallthru
      _
    %505 = vsyncpa [#allocation3], 1
    %506 = vsyncpa [#allocation6], 1
    %507 = vsyncpa [#allocation4], 1

</llo_original>
